<compile_context>
chip_gen: v5e
topology: v5e:2x2
jax: 0.10.0
libtpu: 0.0.40
codegen_flags: <defaults>
</compile_context>

<pallas_src>
import numpy as np
import jax
import jax.numpy as jnp
from jax.experimental import pallas as pl
from jax.experimental.pallas import tpu as pltpu

_NEG = -1e30  # "minus infinity" fill for masked logits (exp underflows to 0)


def _make_kernel(batch_size: int, temperature: float):
    B = batch_size
    inv_t = 1.0 / float(temperature)
    dn = (((1,), (1,)), ((), ()))  # contract lane axis of both operands (A @ B^T)

    def kernel(z1_ref, z2_ref, w_ref, loss_ref):
        f1 = z1_ref[...]                      # (B, D) f32
        f2 = z2_ref[...]                      # (B, D) f32
        w = w_ref[...]                        # (B, 1) f32

        # Four BxB similarity blocks of sim = [f1;f2] @ [f1;f2]^T / T,
        # computed without concatenation or an explicit transpose.
        s11 = jax.lax.dot_general(f1, f1, dn, preferred_element_type=jnp.float32) * inv_t
        s12 = jax.lax.dot_general(f1, f2, dn, preferred_element_type=jnp.float32) * inv_t
        s21 = jax.lax.dot_general(f2, f1, dn, preferred_element_type=jnp.float32) * inv_t
        s22 = jax.lax.dot_general(f2, f2, dn, preferred_element_type=jnp.float32) * inv_t

        row = jax.lax.broadcasted_iota(jnp.int32, (B, B), 0)
        col = jax.lax.broadcasted_iota(jnp.int32, (B, B), 1)
        offdiag = row != col

        # Positives: sim[i, B+i] = diag(s12) for rows 0..B-1,
        #            sim[B+i, i] = diag(s21) for rows B..2B-1,
        # each scaled by the per-instance weight (w_vec.repeat(2, 1)).
        diag12 = jnp.sum(jnp.where(offdiag, 0.0, s12), axis=-1, keepdims=True)  # (B, 1)
        diag21 = jnp.sum(jnp.where(offdiag, 0.0, s21), axis=-1, keepdims=True)  # (B, 1)
        p_top = diag12 * w
        p_bot = diag21 * w

        def half_loss(p, sa, sb):
            # Row-wise CrossEntropy(label=0) over logits [p | offdiag(sa) | offdiag(sb)]
            # = logsumexp(logits) - p, max-stabilized (matches torch's log_softmax).
            na = jnp.where(offdiag, sa, _NEG)
            nb = jnp.where(offdiag, sb, _NEG)
            m = jnp.maximum(
                p,
                jnp.maximum(jnp.max(na, axis=-1, keepdims=True),
                            jnp.max(nb, axis=-1, keepdims=True)))
            ea = jnp.sum(jnp.exp(na - m), axis=-1, keepdims=True)
            eb = jnp.sum(jnp.exp(nb - m), axis=-1, keepdims=True)
            lse = m + jnp.log(jnp.exp(p - m) + ea + eb)
            return jnp.sum(lse - p)

        # Rows 0..B-1 use (s11, s12); rows B..2B-1 use (s22, s21).
        total = half_loss(p_top, s11, s12) + half_loss(p_bot, s22, s21)
        loss_ref[0, 0] = total * (1.0 / (2.0 * B))   # criterion(sum) / N

    return kernel


def weighted_instance_loss(z_i, z_j, w_vec=None, temperature: float = 1.0):
    """Pallas implementation of WeightedInstanceLoss.forward."""
    B, _ = z_i.shape
    f32 = jnp.float32
    if w_vec is None:
        w_vec = jnp.ones((B, 1), f32)
    w_vec = jnp.asarray(w_vec, f32).reshape(B, 1)

    kernel = _make_kernel(B, temperature)

    loss = pl.pallas_call(
        kernel,
        out_shape=jax.ShapeDtypeStruct((1, 1), f32),
        in_specs=[
            pl.BlockSpec(memory_space=pltpu.MemorySpace.VMEM),
            pl.BlockSpec(memory_space=pltpu.MemorySpace.VMEM),
            pl.BlockSpec(memory_space=pltpu.MemorySpace.VMEM),
        ],
        out_specs=pl.BlockSpec(memory_space=pltpu.MemorySpace.SMEM),
    )(z_i.astype(f32), z_j.astype(f32), w_vec)

    return loss[0, 0]


def _reference(z_i, z_j, w_vec, temperature: float = 1.0):
    """Pure-JAX mirror of the PyTorch forward (CrossEntropyLoss, label 0)."""
    B = z_i.shape[0]
    N = 2 * B
    z = jnp.concatenate([z_i, z_j], axis=0)
    sim = (z @ z.T) / temperature
    sim_i_j = jnp.diagonal(sim, offset=B)
    sim_j_i = jnp.diagonal(sim, offset=-B)
    positive = (jnp.concatenate([sim_i_j, sim_j_i]).reshape(N, 1)
                * jnp.tile(jnp.asarray(w_vec).reshape(B, 1), (2, 1)))
    mask = np.ones((N, N), dtype=bool)
    np.fill_diagonal(mask, False)
    for i in range(B):
        mask[i, B + i] = False
        mask[B + i, i] = False
    rows, cols = np.nonzero(mask)
    negative = sim[rows, cols].reshape(N, N - 2)
    logits = jnp.concatenate([positive, negative], axis=1)
    lse = jax.scipy.special.logsumexp(logits, axis=1)
    loss = jnp.sum(lse - logits[:, 0]) / N
    return loss


if __name__ == "__main__":
    B, D = 8, 32   # batch=8, hidden=32
    key = jax.random.PRNGKey(0)
    k1, k2, k3 = jax.random.split(key, 3)
    z_i = jax.random.normal(k1, (B, D), dtype=jnp.float32)
    z_j = jax.random.normal(k2, (B, D), dtype=jnp.float32)
    # normalize like typical contrastive embeddings
    z_i = z_i / jnp.linalg.norm(z_i, axis=-1, keepdims=True)
    z_j = z_j / jnp.linalg.norm(z_j, axis=-1, keepdims=True)
    # Deterministic stand-in for view_weights(z_i, z_j, 30) (see TODO above).
    w_vec = 0.5 + jax.random.uniform(k3, (B, 1), dtype=jnp.float32)

    temperature = 0.5
    loss = weighted_instance_loss(z_i, z_j, w_vec, temperature=temperature)
    jax.block_until_ready(loss)

    ref = _reference(z_i, z_j, w_vec, temperature=temperature)
    np.testing.assert_allclose(np.asarray(loss), np.asarray(ref), rtol=1e-4, atol=1e-4)

    print("KERNEL_OK")
</pallas_src>

<mosaic_0001>
module attributes {stable_mosaic.version = 11 : i64} {
  func.func @kernel(%arg0: memref<8x32xf32, #tpu.memory_space<vmem>>, %arg1: memref<8x32xf32, #tpu.memory_space<vmem>>, %arg2: memref<8x1xf32, #tpu.memory_space<vmem>>, %arg3: memref<1x1xf32, #tpu.memory_space<smem>>) attributes {dimension_semantics = [], scalar_prefetch = 0 : i64, scratch_operands = 0 : i64, tpu.core_type = #tpu.core_type<tc>} {
    %c0 = arith.constant 0 : index
    %c0_0 = arith.constant 0 : index
    %0 = vector.load %arg0[%c0, %c0_0] : memref<8x32xf32, #tpu.memory_space<vmem>>, vector<8x32xf32>
    %c0_1 = arith.constant 0 : index
    %c0_2 = arith.constant 0 : index
    %1 = vector.load %arg1[%c0_1, %c0_2] : memref<8x32xf32, #tpu.memory_space<vmem>>, vector<8x32xf32>
    %c0_3 = arith.constant 0 : index
    %c0_4 = arith.constant 0 : index
    %2 = vector.load %arg2[%c0_3, %c0_4] : memref<8x1xf32, #tpu.memory_space<vmem>>, vector<8x1xf32>
    %cst = arith.constant dense<0.000000e+00> : vector<8x8xf32>
    %3 = tpu.matmul %0, %0, %cst {dimension_numbers = #tpu.dot_dimension_numbers<[1], [1], [0], [0], [0, 0, 1, 0], [], []>} : vector<8x32xf32>, vector<8x32xf32>, vector<8x8xf32> -> vector<8x8xf32>
    %cst_5 = arith.constant 2.000000e+00 : f32
    %4 = vector.broadcast %cst_5 : f32 to vector<8x8xf32>
    %5 = arith.mulf %3, %4 : vector<8x8xf32>
    %cst_6 = arith.constant dense<0.000000e+00> : vector<8x8xf32>
    %6 = tpu.matmul %0, %1, %cst_6 {dimension_numbers = #tpu.dot_dimension_numbers<[1], [1], [0], [0], [0, 0, 1, 0], [], []>} : vector<8x32xf32>, vector<8x32xf32>, vector<8x8xf32> -> vector<8x8xf32>
    %cst_7 = arith.constant 2.000000e+00 : f32
    %7 = vector.broadcast %cst_7 : f32 to vector<8x8xf32>
    %8 = arith.mulf %6, %7 : vector<8x8xf32>
    %cst_8 = arith.constant dense<0.000000e+00> : vector<8x8xf32>
    %9 = tpu.matmul %1, %0, %cst_8 {dimension_numbers = #tpu.dot_dimension_numbers<[1], [1], [0], [0], [0, 0, 1, 0], [], []>} : vector<8x32xf32>, vector<8x32xf32>, vector<8x8xf32> -> vector<8x8xf32>
    %cst_9 = arith.constant 2.000000e+00 : f32
    %10 = vector.broadcast %cst_9 : f32 to vector<8x8xf32>
    %11 = arith.mulf %9, %10 : vector<8x8xf32>
    %cst_10 = arith.constant dense<0.000000e+00> : vector<8x8xf32>
    %12 = tpu.matmul %1, %1, %cst_10 {dimension_numbers = #tpu.dot_dimension_numbers<[1], [1], [0], [0], [0, 0, 1, 0], [], []>} : vector<8x32xf32>, vector<8x32xf32>, vector<8x8xf32> -> vector<8x8xf32>
    %cst_11 = arith.constant 2.000000e+00 : f32
    %13 = vector.broadcast %cst_11 : f32 to vector<8x8xf32>
    %14 = arith.mulf %12, %13 : vector<8x8xf32>
    %15 = tpu.iota {dimensions = array<i32: 0>} : vector<8x8xi32>
    %16 = tpu.iota {dimensions = array<i32: 1>} : vector<8x8xi32>
    %17 = arith.cmpi ne, %15, %16 : vector<8x8xi32>
    %cst_12 = arith.constant 0.000000e+00 : f32
    %18 = vector.broadcast %cst_12 : f32 to vector<8x8xf32>
    %19 = arith.select %17, %18, %8 : vector<8x8xi1>, vector<8x8xf32>
    %cst_13 = arith.constant dense<0.000000e+00> : vector<8xf32>
    %20 = vector.multi_reduction <add>, %19, %cst_13 [1] : vector<8x8xf32> to vector<8xf32>
    %21 = vector.shape_cast %20 : vector<8xf32> to vector<8x1xf32>
    %cst_14 = arith.constant 0.000000e+00 : f32
    %22 = vector.broadcast %cst_14 : f32 to vector<8x8xf32>
    %23 = arith.select %17, %22, %11 : vector<8x8xi1>, vector<8x8xf32>
    %cst_15 = arith.constant dense<0.000000e+00> : vector<8xf32>
    %24 = vector.multi_reduction <add>, %23, %cst_15 [1] : vector<8x8xf32> to vector<8xf32>
    %25 = vector.shape_cast %24 : vector<8xf32> to vector<8x1xf32>
    %26 = arith.mulf %21, %2 : vector<8x1xf32>
    %27 = arith.mulf %25, %2 : vector<8x1xf32>
    %cst_16 = arith.constant -1.000000e+30 : f32
    %28 = vector.broadcast %cst_16 : f32 to vector<8x8xf32>
    %29 = arith.select %17, %5, %28 : vector<8x8xi1>, vector<8x8xf32>
    %cst_17 = arith.constant -1.000000e+30 : f32
    %30 = vector.broadcast %cst_17 : f32 to vector<8x8xf32>
    %31 = arith.select %17, %8, %30 : vector<8x8xi1>, vector<8x8xf32>
    %cst_18 = arith.constant dense<0xFF800000> : vector<8xf32>
    %32 = vector.multi_reduction <maximumf>, %29, %cst_18 [1] : vector<8x8xf32> to vector<8xf32>
    %33 = vector.shape_cast %32 : vector<8xf32> to vector<8x1xf32>
    %cst_19 = arith.constant dense<0xFF800000> : vector<8xf32>
    %34 = vector.multi_reduction <maximumf>, %31, %cst_19 [1] : vector<8x8xf32> to vector<8xf32>
    %35 = vector.shape_cast %34 : vector<8xf32> to vector<8x1xf32>
    %36 = arith.maximumf %33, %35 : vector<8x1xf32>
    %37 = arith.maximumf %26, %36 : vector<8x1xf32>
    %38 = vector.broadcast %37 : vector<8x1xf32> to vector<8x8xf32>
    %39 = arith.subf %29, %38 : vector<8x8xf32>
    %40 = math.exp %39 : vector<8x8xf32>
    %cst_20 = arith.constant dense<0.000000e+00> : vector<8xf32>
    %41 = vector.multi_reduction <add>, %40, %cst_20 [1] : vector<8x8xf32> to vector<8xf32>
    %42 = vector.shape_cast %41 : vector<8xf32> to vector<8x1xf32>
    %43 = vector.broadcast %37 : vector<8x1xf32> to vector<8x8xf32>
    %44 = arith.subf %31, %43 : vector<8x8xf32>
    %45 = math.exp %44 : vector<8x8xf32>
    %cst_21 = arith.constant dense<0.000000e+00> : vector<8xf32>
    %46 = vector.multi_reduction <add>, %45, %cst_21 [1] : vector<8x8xf32> to vector<8xf32>
    %47 = vector.shape_cast %46 : vector<8xf32> to vector<8x1xf32>
    %48 = arith.subf %26, %37 : vector<8x1xf32>
    %49 = math.exp %48 : vector<8x1xf32>
    %50 = arith.addf %49, %42 : vector<8x1xf32>
    %51 = arith.addf %50, %47 : vector<8x1xf32>
    %52 = math.log %51 : vector<8x1xf32>
    %53 = arith.addf %37, %52 : vector<8x1xf32>
    %54 = arith.subf %53, %26 : vector<8x1xf32>
    %55 = vector.shape_cast %54 : vector<8x1xf32> to vector<1x8x1xf32>
    %cst_22 = arith.constant dense<0.000000e+00> : vector<1xf32>
    %56 = vector.multi_reduction <add>, %55, %cst_22 [1, 2] : vector<1x8x1xf32> to vector<1xf32>
    %57 = vector.shape_cast %56 : vector<1xf32> to vector<1x1x1xf32>
    %58 = vector.extract %57[0, 0, 0] : f32 from vector<1x1x1xf32>
    %cst_23 = arith.constant -1.000000e+30 : f32
    %59 = vector.broadcast %cst_23 : f32 to vector<8x8xf32>
    %60 = arith.select %17, %14, %59 : vector<8x8xi1>, vector<8x8xf32>
    %cst_24 = arith.constant -1.000000e+30 : f32
    %61 = vector.broadcast %cst_24 : f32 to vector<8x8xf32>
    %62 = arith.select %17, %11, %61 : vector<8x8xi1>, vector<8x8xf32>
    %cst_25 = arith.constant dense<0xFF800000> : vector<8xf32>
    %63 = vector.multi_reduction <maximumf>, %60, %cst_25 [1] : vector<8x8xf32> to vector<8xf32>
    %64 = vector.shape_cast %63 : vector<8xf32> to vector<8x1xf32>
    %cst_26 = arith.constant dense<0xFF800000> : vector<8xf32>
    %65 = vector.multi_reduction <maximumf>, %62, %cst_26 [1] : vector<8x8xf32> to vector<8xf32>
    %66 = vector.shape_cast %65 : vector<8xf32> to vector<8x1xf32>
    %67 = arith.maximumf %64, %66 : vector<8x1xf32>
    %68 = arith.maximumf %27, %67 : vector<8x1xf32>
    %69 = vector.broadcast %68 : vector<8x1xf32> to vector<8x8xf32>
    %70 = arith.subf %60, %69 : vector<8x8xf32>
    %71 = math.exp %70 : vector<8x8xf32>
    %cst_27 = arith.constant dense<0.000000e+00> : vector<8xf32>
    %72 = vector.multi_reduction <add>, %71, %cst_27 [1] : vector<8x8xf32> to vector<8xf32>
    %73 = vector.shape_cast %72 : vector<8xf32> to vector<8x1xf32>
    %74 = vector.broadcast %68 : vector<8x1xf32> to vector<8x8xf32>
    %75 = arith.subf %62, %74 : vector<8x8xf32>
    %76 = math.exp %75 : vector<8x8xf32>
    %cst_28 = arith.constant dense<0.000000e+00> : vector<8xf32>
    %77 = vector.multi_reduction <add>, %76, %cst_28 [1] : vector<8x8xf32> to vector<8xf32>
    %78 = vector.shape_cast %77 : vector<8xf32> to vector<8x1xf32>
    %79 = arith.subf %27, %68 : vector<8x1xf32>
    %80 = math.exp %79 : vector<8x1xf32>
    %81 = arith.addf %80, %73 : vector<8x1xf32>
    %82 = arith.addf %81, %78 : vector<8x1xf32>
    %83 = math.log %82 : vector<8x1xf32>
    %84 = arith.addf %68, %83 : vector<8x1xf32>
    %85 = arith.subf %84, %27 : vector<8x1xf32>
    %86 = vector.shape_cast %85 : vector<8x1xf32> to vector<1x8x1xf32>
    %cst_29 = arith.constant dense<0.000000e+00> : vector<1xf32>
    %87 = vector.multi_reduction <add>, %86, %cst_29 [1, 2] : vector<1x8x1xf32> to vector<1xf32>
    %88 = vector.shape_cast %87 : vector<1xf32> to vector<1x1x1xf32>
    %89 = vector.extract %88[0, 0, 0] : f32 from vector<1x1x1xf32>
    %90 = arith.addf %58, %89 : f32
    %cst_30 = arith.constant 6.250000e-02 : f32
    %91 = arith.mulf %90, %cst_30 : f32
    %c0_31 = arith.constant 0 : index
    %c0_32 = arith.constant 0 : index
    %92 = memref.load %arg3[%c0_31, %c0_32] : memref<1x1xf32, #tpu.memory_space<smem>>
    memref.store %91, %arg3[%c0_31, %c0_32] : memref<1x1xf32, #tpu.memory_space<smem>>
    return
  }
}

</mosaic_0001>

<llo_original>
// kernel: tpu_custom_call.1
$region0: #{tpu_custom_call.1}
  #allocation0 [shape = 'u32[]', space=smem, size = 0x4, offset = 0x4, fixed_abs, tag = 'smem constant byte address 0x4 - core index']
  #allocation1 [shape = 'u32[72,128]{1,0:T(1,128)}', space=vmem, size = 0x9000, scoped, tag = 'internal scratch']
  %s0 = inlined_call_operand.vmem [shape: f32[8,32], index: 0, kind: input, shape index: {}]
  %s1 = inlined_call_operand.hbm [shape: f32[8,32], index: 1, kind: input, shape index: {}]
  %s2 = inlined_call_operand.vmem [shape: f32[8,1], index: 2, kind: input, shape index: {}]
  %s3 = inlined_call_operand.hbm [shape: f32[1,1], index: 3, kind: output, shape index: {}]
  %s4 = sld [smem:[#allocation0]]
  $region26: #{tpu_custom_call.1} parent=0
    _
  %s6 = ssub.s32 1, %s4
  %s7 = scalar_select 0, %s6, %s4
  $region1: #{tpu_custom_call.1} parent=0
    #allocation2 [shape = 'u8[4096]{0}', space=vmem, size = 0x1000, scoped, tag = 'input window, operand 1, single buffered']
    #allocation3 [shape = 's32[1]{0}', space=sflag, size = 0x4, scoped, tag = 'scoped memory for tpu_custom_call.1']
    #allocation4 [shape = 's32[1]{0}', space=sflag, size = 0x4, scoped, tag = 'scoped memory for tpu_custom_call.1']
    #allocation5 [shape = 'u8[512]{0}', space=smem, size = 0x200, scoped, tag = 'output window, operand 0, single buffered']
    %8 = vsyncpa [#allocation3], 0
    %9 = vsyncpa [#allocation4], 0
    // Predicated region
    $region2: #{tpu_custom_call.1} parent=1 // pred_check
      _
    $region3: #{tpu_custom_call.1} parent=1 // pred_check_branch
      %11 = sbr.rel (0) target = $region5
    $region4: #{tpu_custom_call.1} parent=1 // pred_region
      _
    $region5: #{tpu_custom_call.1} parent=1 // pred_fallthru
      _
    // Predicated region
    $region6: #{tpu_custom_call.1} parent=1 // pred_check
      _
    $region7: #{tpu_custom_call.1} parent=1 // pred_check_branch
      %13 = sbr.rel (0) target = $region9
    $region8: #{tpu_custom_call.1} parent=1 // pred_region
      %15 = vsyncadd [#allocation3], 0
      %s17 = sshll.u32 %s1, 4
      %s18 = int_to_ptr.hbm [resolvable:$true] %s17
      %s19 = sshll.u32 [#allocation2], 4
      %s20 = int_to_ptr.vmem [resolvable:$true] %s19
      %22 = dma.hbm_to_vmem [thread:$0]  %s18, 128, %s20, [#allocation3]
    $region9: #{tpu_custom_call.1} parent=1 // pred_fallthru
      _
    // Predicated region
    $region10: #{tpu_custom_call.1} parent=1 // pred_check
      _
    $region11: #{tpu_custom_call.1} parent=1 // pred_check_branch
      %24 = sbr.rel (0) target = $region13
    $region12: #{tpu_custom_call.1} parent=1 // pred_region
      _
    $region13: #{tpu_custom_call.1} parent=1 // pred_fallthru
      _
    // Predicated region
    $region14: #{tpu_custom_call.1} parent=1 // pred_check
      _
    $region15: #{tpu_custom_call.1} parent=1 // pred_check_branch
      %26 = sbr.rel (0) target = $region17
    $region16: #{tpu_custom_call.1} parent=1 // pred_region
      %28 = dma.done [#allocation3], 128
    $region17: #{tpu_custom_call.1} parent=1 // pred_fallthru
      _
    %v29 = vld [vmem:[%s0] sm:$0xff]
    %v30 = vld [vmem:[#allocation2] sm:$0xff]
    %v31 = vld [vmem:[%s2] sm:$0xff]
    %vm32 = vcmask 261120
    %v34 = vsel %vm32, %v29, 0
    %36 = vmatpush.xpose.msra.mxu0 0.0
    %37 = vmatpush.xpose.msra.mxu0 0.0
    %38 = vmatpush.xpose.msra.mxu0 0.0
    %39 = vmatpush.xpose.msra.mxu0 0.0
    %40 = vmatpush.xpose.msra.mxu0 0.0
    %41 = vmatpush.xpose.msra.mxu0 0.0
    %42 = vmatpush.xpose.msra.mxu0 0.0
    %43 = vmatpush.xpose.msra.mxu0 0.0
    %44 = vmatpush.xpose.msra.mxu0 0.0
    %45 = vmatpush.xpose.msra.mxu0 0.0
    %46 = vmatpush.xpose.msra.mxu0 0.0
    %47 = vmatpush.xpose.msra.mxu0 0.0
    %48 = vmatpush.xpose.msra.mxu0 0.0
    %49 = vmatpush.xpose.msra.mxu0 0.0
    %50 = vmatpush.xpose.msra.mxu0 0.0
    %51 = vmatpush.xpose.msra.mxu0 %v34
    %52 = vmatmul.f32.gmra.mxu0 %v34
    %v53 = vpop.f32.mrf.mxu0
    %v54 = vadd.f32 0.0, %v53
    %55 = vdwg.mxu0
    %v56 = vmul.f32 %v54, 2.0
    %v58 = vsel %vm32, %v30, 0
    %60 = vmatpush.xpose.msra.mxu0 0.0
    %61 = vmatpush.xpose.msra.mxu0 0.0
    %62 = vmatpush.xpose.msra.mxu0 0.0
    %63 = vmatpush.xpose.msra.mxu0 0.0
    %64 = vmatpush.xpose.msra.mxu0 0.0
    %65 = vmatpush.xpose.msra.mxu0 0.0
    %66 = vmatpush.xpose.msra.mxu0 0.0
    %67 = vmatpush.xpose.msra.mxu0 0.0
    %68 = vmatpush.xpose.msra.mxu0 0.0
    %69 = vmatpush.xpose.msra.mxu0 0.0
    %70 = vmatpush.xpose.msra.mxu0 0.0
    %71 = vmatpush.xpose.msra.mxu0 0.0
    %72 = vmatpush.xpose.msra.mxu0 0.0
    %73 = vmatpush.xpose.msra.mxu0 0.0
    %74 = vmatpush.xpose.msra.mxu0 0.0
    %75 = vmatpush.xpose.msra.mxu0 %v58
    %76 = vmatmul.f32.gmra.mxu0 %v34
    %v77 = vpop.f32.mrf.mxu0
    %v78 = vadd.f32 0.0, %v77
    %79 = vdwg.mxu0
    %v80 = vmul.f32 %v78, 2.0
    %81 = vmatpush.xpose.msra.mxu0 0.0
    %82 = vmatpush.xpose.msra.mxu0 0.0
    %83 = vmatpush.xpose.msra.mxu0 0.0
    %84 = vmatpush.xpose.msra.mxu0 0.0
    %85 = vmatpush.xpose.msra.mxu0 0.0
    %86 = vmatpush.xpose.msra.mxu0 0.0
    %87 = vmatpush.xpose.msra.mxu0 0.0
    %88 = vmatpush.xpose.msra.mxu0 0.0
    %89 = vmatpush.xpose.msra.mxu0 0.0
    %90 = vmatpush.xpose.msra.mxu0 0.0
    %91 = vmatpush.xpose.msra.mxu0 0.0
    %92 = vmatpush.xpose.msra.mxu0 0.0
    %93 = vmatpush.xpose.msra.mxu0 0.0
    %94 = vmatpush.xpose.msra.mxu0 0.0
    %95 = vmatpush.xpose.msra.mxu0 0.0
    %96 = vmatpush.xpose.msra.mxu0 %v34
    %97 = vmatmul.f32.gmra.mxu0 %v58
    %v98 = vpop.f32.mrf.mxu0
    %v99 = vadd.f32 0.0, %v98
    %100 = vdwg.mxu0
    %v101 = vmul.f32 %v99, 2.0
    %102 = vmatpush.xpose.msra.mxu0 0.0
    %103 = vmatpush.xpose.msra.mxu0 0.0
    %104 = vmatpush.xpose.msra.mxu0 0.0
    %105 = vmatpush.xpose.msra.mxu0 0.0
    %106 = vmatpush.xpose.msra.mxu0 0.0
    %107 = vmatpush.xpose.msra.mxu0 0.0
    %108 = vmatpush.xpose.msra.mxu0 0.0
    %109 = vmatpush.xpose.msra.mxu0 0.0
    %110 = vmatpush.xpose.msra.mxu0 0.0
    %111 = vmatpush.xpose.msra.mxu0 0.0
    %112 = vmatpush.xpose.msra.mxu0 0.0
    %113 = vmatpush.xpose.msra.mxu0 0.0
    %114 = vmatpush.xpose.msra.mxu0 0.0
    %115 = vmatpush.xpose.msra.mxu0 0.0
    %116 = vmatpush.xpose.msra.mxu0 0.0
    %117 = vmatpush.xpose.msra.mxu0 %v58
    %118 = vmatmul.f32.gmra.mxu0 %v58
    %v119 = vpop.f32.mrf.mxu0
    %v120 = vadd.f32 0.0, %v119
    %121 = vdwg.mxu0
    %v122 = vmul.f32 %v120, 2.0
    %v123 = vlaneseq
    %v124 = vshrl.u32 %v123, 7
    %v125 = vlaneseq
    %v126 = vand.u32 %v125, 127
    %vm127 = vcmp.ne.s32.totalorder %v124, %v126
    %v128 = vsel %vm127, 0.0, %v80
    %vm129 = vcmask 64512
    %v130 = vsel %vm129, %v128, 0.0
    %131 = vadd.xlane.f32.xlu0 %v130
    %v132 = vpop.xlane.xlu0 %131
    %v133 = vsel %vm127, 0.0, %v101
    %v134 = vsel %vm129, %v133, 0.0
    %135 = vadd.xlane.f32.xlu0 %v134
    %v136 = vpop.xlane.xlu0 %135
    %v137 = vmul.f32 %v132, %v31
    %v138 = vmul.f32 %v136, %v31
    %v139 = vsel %vm127, %v56, -1e+30
    %v140 = vsel %vm127, %v80, -1e+30
    %v141 = vsel %vm129, %v139, -inf
    %142 = vmax.xlane.f32.xlu0 %v141
    %v143 = vpop.xlane.xlu0 %142
    %v144 = vsel %vm129, %v140, -inf
    %145 = vmax.xlane.f32.xlu0 %v144
    %v146 = vpop.xlane.xlu0 %145
    %v147 = vmax.f32 %v143, %v146
    %v148 = vmax.f32 %v137, %v147
    %150 = vset.pattern.permute.xlu0 0
    %151 = vperm.xlu0 %150, %v148
    %v152 = vpop.permute.xlu0 %151
    %v154 = vsub.f32 %v139, %v152
    %v155 = vmul.f32 %v154, 1.442695
    %v156 = vpow.pop %v155
    %v157 = vsel %vm129, %v156, 0.0
    %158 = vadd.xlane.f32.xlu0 %v157
    %v159 = vpop.xlane.xlu0 %158
    %v160 = vsub.f32 %v140, %v152
    %v161 = vmul.f32 %v160, 1.442695
    %v162 = vpow.pop %v161
    %v163 = vsel %vm129, %v162, 0.0
    %164 = vadd.xlane.f32.xlu0 %v163
    %v165 = vpop.xlane.xlu0 %164
    %v166 = vsub.f32 %v137, %v148
    %v167 = vmul.f32 %v166, 1.442695
    %v168 = vpow.pop %v167
    %v169 = vadd.f32 %v168, %v159
    %v170 = vadd.f32 %v169, %v165
    %v171 = vlog2.pop %v170
    %v172 = vmul.f32 %v171, 0.6931472
    %v173 = vadd.f32 %v148, %v172
    %v174 = vsub.f32 %v173, %v137
    %vm175 = vcmask 7168
    %v176 = vsel %vm175, %v174, 0.0
    %177 = vadd.xlane.f32.xlu0 %v176
    %v178 = vpop.xlane.xlu0 %177
    %v179 = vrot.slane %v178, 4
    %v180 = vadd.f32 %v178, %v179
    %v181 = vrot.slane %v180, 2
    %v182 = vadd.f32 %v180, %v181
    %v183 = vrot.slane %v182, 1
    %v184 = vadd.f32 %v182, %v183
    %s185 = vtos %v184
    %v186 = vsel %vm127, %v122, -1e+30
    %v187 = vsel %vm127, %v101, -1e+30
    %v188 = vsel %vm129, %v186, -inf
    %189 = vmax.xlane.f32.xlu0 %v188
    %v190 = vpop.xlane.xlu0 %189
    %v191 = vsel %vm129, %v187, -inf
    %192 = vmax.xlane.f32.xlu0 %v191
    %v193 = vpop.xlane.xlu0 %192
    %v194 = vmax.f32 %v190, %v193
    %v195 = vmax.f32 %v138, %v194
    %197 = vset.pattern.permute.xlu0 0
    %198 = vperm.xlu0 %197, %v195
    %v199 = vpop.permute.xlu0 %198
    %v201 = vsub.f32 %v186, %v199
    %v202 = vmul.f32 %v201, 1.442695
    %v203 = vpow.pop %v202
    %v204 = vsel %vm129, %v203, 0.0
    %205 = vadd.xlane.f32.xlu0 %v204
    %v206 = vpop.xlane.xlu0 %205
    %v207 = vsub.f32 %v187, %v199
    %v208 = vmul.f32 %v207, 1.442695
    %v209 = vpow.pop %v208
    %v210 = vsel %vm129, %v209, 0.0
    %211 = vadd.xlane.f32.xlu0 %v210
    %v212 = vpop.xlane.xlu0 %211
    %v213 = vsub.f32 %v138, %v195
    %v214 = vmul.f32 %v213, 1.442695
    %v215 = vpow.pop %v214
    %v216 = vadd.f32 %v215, %v206
    %v217 = vadd.f32 %v216, %v212
    %v218 = vlog2.pop %v217
    %v219 = vmul.f32 %v218, 0.6931472
    %v220 = vadd.f32 %v195, %v219
    %v221 = vsub.f32 %v220, %v138
    %v222 = vsel %vm175, %v221, 0.0
    %223 = vadd.xlane.f32.xlu0 %v222
    %v224 = vpop.xlane.xlu0 %223
    %v225 = vrot.slane %v224, 4
    %v226 = vadd.f32 %v224, %v225
    %v227 = vrot.slane %v226, 2
    %v228 = vadd.f32 %v226, %v227
    %v229 = vrot.slane %v228, 1
    %v230 = vadd.f32 %v228, %v229
    %s231 = vtos %v230
    %s232 = sadd.f32 %s185, %s231
    %s233 = smul.f32 %s232, 0.0625
    %s234 = scalar_lea.smem [#allocation5], 0
    %235 = sst [smem:[%s234]] %s233
    // Predicated region
    $region18: #{tpu_custom_call.1} parent=1 // pred_check
      _
    $region19: #{tpu_custom_call.1} parent=1 // pred_check_branch
      %237 = sbr.rel (0) target = $region21
    $region20: #{tpu_custom_call.1} parent=1 // pred_region
      %239 = vsyncadd [#allocation4], 0
      %s241 = sshll.u32 %s3, 4
      %s242 = int_to_ptr.hbm [resolvable:$true] %s241
      %244 = dma.smem_to_hbm [#allocation5], 16, %s242, [#allocation4]
    $region21: #{tpu_custom_call.1} parent=1 // pred_fallthru
      _
    // Predicated region
    $region22: #{tpu_custom_call.1} parent=1 // pred_check
      _
    $region23: #{tpu_custom_call.1} parent=1 // pred_check_branch
      %246 = sbr.rel (0) target = $region25
    $region24: #{tpu_custom_call.1} parent=1 // pred_region
      %248 = dma.done [#allocation4], 16
    $region25: #{tpu_custom_call.1} parent=1 // pred_fallthru
      _
    %249 = sfence
    %250 = vsyncpa [#allocation3], 1
    %251 = vsyncpa [#allocation4], 1

</llo_original>
